<compile_context>
chip_gen: v7x
topology: tpu7x:2x2x1
jax: 0.10.0
libtpu: 0.0.40
codegen_flags: <defaults>
</compile_context>

<pallas_src>
import functools

import jax
import jax.numpy as jnp
from jax import lax
from jax.experimental import pallas as pl
from jax.experimental.pallas import tpu as pltpu


def _ce_partial_kernel(x_ref, t_ref, out_ref, *, n_rows, mask_rows):
    """One row tile -> scalar partial sum of per-row cross-entropy."""
    tm = x_ref.shape[0]

    x = x_ref[...].astype(jnp.float32)                   # (tm, C)
    t = t_ref[...]                                        # (tm, 1) int32

    # Numerically stable log-sum-exp per row.
    row_max = jnp.max(x, axis=-1, keepdims=True)          # (tm, 1)
    lse = jnp.log(jnp.sum(jnp.exp(x - row_max), axis=-1,
                          keepdims=True)) + row_max       # (tm, 1)

    # Target logit via one-hot select (no per-row dynamic gather on TPU).
    # (1, C) iota broadcast against (tm, 1) targets avoids a (tm, C) int32
    # temporary.
    col = lax.broadcasted_iota(jnp.int32, (1, x.shape[1]), 1)
    tgt = jnp.sum(jnp.where(col == t, x, 0.0), axis=-1, keepdims=True)

    per_row = lse - tgt                                    # (tm, 1)

    if mask_rows:
        # Only emitted when n % tile_rows != 0 (statically known). A cheap
        # (tm, 1) mask on the per-row result is enough: every reduction above
        # is row-wise, so garbage rows of the partial last block cannot
        # contaminate valid ones, and where(False, NaN, 0) == 0.
        i = pl.program_id(0)
        row = i * tm + lax.broadcasted_iota(jnp.int32, (tm, 1), 0)
        per_row = jnp.where(row < n_rows, per_row, 0.0)

    out_ref[0, 0] = jnp.sum(per_row)


def multi_softmax_loss(logits, target, class_n, *,
                       target_block_bytes=2 << 20,
                       max_tile_rows=4096,
                       vmem_limit_bytes=40 * 1024 * 1024):
    """Equivalent to MultiSofmaxLoss(class_n)(logits, target) (mean CE)."""
    x = logits.reshape(-1, class_n)
    t = target.reshape(-1, 1).astype(jnp.int32)
    n, c = x.shape

    itemsize = jnp.dtype(x.dtype).itemsize

    # VMEM bytes consumed per tile row:
    #   2x double-buffered logits block
    # + 2x double-buffered (rows, 1) int32 target block (minor dim pads to
    #   128 lanes -> 512 B/row)
    # + ~3 f32 (rows, C) temporaries (cast, exp, one-hot select).
    per_row_bytes = 2 * c * itemsize + 2 * 128 * 4 + 3 * c * 4
    rows_budget = (vmem_limit_bytes * 3 // 5) // per_row_bytes
    rows_block = target_block_bytes // (c * itemsize)
    rows_fit = (min(rows_budget, rows_block, max_tile_rows) // 16) * 16
    rows_fit = max(16, rows_fit)   # multiple of 16 (bf16 sublane packing)

    if n >= 4 * 16:
        # Keep >= ~4 grid steps when possible so the DMA pipeline stays full
        # and the "parallel" row axis can shard across both v7x TensorCores.
        tile_rows = min(rows_fit, max(16, ((n // 4) // 16) * 16))
    else:
        tile_rows = n              # single block == full row dim (any n legal)

    num_tiles = (n + tile_rows - 1) // tile_rows
    mask_rows = (n % tile_rows) != 0

    kernel = functools.partial(_ce_partial_kernel,
                               n_rows=n, mask_rows=mask_rows)

    cost = pl.CostEstimate(
        flops=5 * n * c,
        transcendentals=n * c,
        bytes_accessed=n * c * itemsize + n * 4 + num_tiles * 4,
    )

    partials = pl.pallas_call(
        kernel,
        out_shape=jax.ShapeDtypeStruct((num_tiles, 1), jnp.float32),
        grid_spec=pltpu.PrefetchScalarGridSpec(
            num_scalar_prefetch=0,
            grid=(num_tiles,),
            in_specs=[
                pl.BlockSpec((tile_rows, c), lambda i: (i, 0)),
                pl.BlockSpec((tile_rows, 1), lambda i: (i, 0)),
            ],
            out_specs=pl.BlockSpec((1, 1), lambda i: (i, 0),
                                   memory_space=pltpu.SMEM),
        ),
        compiler_params=pltpu.CompilerParams(
            dimension_semantics=("parallel",),
            vmem_limit_bytes=vmem_limit_bytes,
        ),
        cost_estimate=cost,
    )(x, t)

    # PyTorch CrossEntropyLoss default reduction='mean' over all rows.
    return jnp.sum(partials) / jnp.float32(n)


def _reference(logits, target, class_n):
    x = logits.reshape(-1, class_n).astype(jnp.float32)
    t = target.reshape(-1).astype(jnp.int32)
    lse = jax.nn.logsumexp(x, axis=-1)
    tgt = jnp.take_along_axis(x, t[:, None], axis=-1)[:, 0]
    return jnp.mean(lse - tgt)


if __name__ == "__main__":
    key = jax.random.PRNGKey(0)
    k1, k2, k3, k4 = jax.random.split(key, 4)

    # Case 1: tiny f32 input, single tile (batch=2, seq=8, class_n=32).
    class_n = 32
    logits = jax.random.normal(k1, (2, 8, class_n), dtype=jnp.float32)
    target = jax.random.randint(k2, (2, 8), 0, class_n, dtype=jnp.int32)
    loss = jax.block_until_ready(multi_softmax_loss(logits, target, class_n))
    ref = _reference(logits, target, class_n)
    assert jnp.allclose(loss, ref, rtol=1e-5, atol=1e-5), (loss, ref)

    # Case 2: bf16 input, multiple tiles with a partial last tile
    # (batch=2, seq=100, class_n=128 -> n=200 rows -> 5 tiles of 48 rows).
    class_n2 = 128
    logits2 = jax.random.normal(k3, (2, 100, class_n2),
                                dtype=jnp.float32).astype(jnp.bfloat16)
    target2 = jax.random.randint(k4, (2, 100), 0, class_n2, dtype=jnp.int32)
    loss2 = jax.block_until_ready(
        multi_softmax_loss(logits2, target2, class_n2))
    ref2 = _reference(logits2, target2, class_n2)
    assert jnp.allclose(loss2, ref2, rtol=1e-4, atol=1e-4), (loss2, ref2)

    print("KERNEL_OK")
</pallas_src>

<mosaic_0001>
module attributes {stable_mosaic.version = 11 : i64} {
  func.func @_ce_partial_kernel(%arg0: i32, %arg1: memref<16x32xf32, #tpu.memory_space<vmem>>, %arg2: memref<16x1xi32, #tpu.memory_space<vmem>>, %arg3: memref<1x1xf32, #tpu.memory_space<smem>>) attributes {dimension_semantics = [#tpu.dimension_semantics<parallel>], iteration_bounds = array<i64: 1>, scalar_prefetch = 0 : i64, scratch_operands = 0 : i64, tpu.core_type = #tpu.core_type<tc>, window_params = [{transform_indices = @transform_0, window_bounds = array<i64: 16, 32>}, {transform_indices = @transform_1, window_bounds = array<i64: 16, 1>}, {transform_indices = @transform_2, window_bounds = array<i64: 1, 1>}]} {
    %c0 = arith.constant 0 : index
    %c0_0 = arith.constant 0 : index
    %0 = vector.load %arg1[%c0, %c0_0] : memref<16x32xf32, #tpu.memory_space<vmem>>, vector<16x32xf32>
    %c0_1 = arith.constant 0 : index
    %c0_2 = arith.constant 0 : index
    %1 = vector.load %arg2[%c0_1, %c0_2] : memref<16x1xi32, #tpu.memory_space<vmem>>, vector<16x1xi32>
    %cst = arith.constant dense<0xFF800000> : vector<16xf32>
    %2 = vector.multi_reduction <maximumf>, %0, %cst [1] : vector<16x32xf32> to vector<16xf32>
    %3 = vector.shape_cast %2 : vector<16xf32> to vector<16x1xf32>
    %4 = vector.broadcast %3 : vector<16x1xf32> to vector<16x32xf32>
    %5 = arith.subf %0, %4 : vector<16x32xf32>
    %6 = math.exp %5 : vector<16x32xf32>
    %cst_3 = arith.constant dense<0.000000e+00> : vector<16xf32>
    %7 = vector.multi_reduction <add>, %6, %cst_3 [1] : vector<16x32xf32> to vector<16xf32>
    %8 = vector.shape_cast %7 : vector<16xf32> to vector<16x1xf32>
    %9 = math.log %8 : vector<16x1xf32>
    %10 = arith.addf %9, %3 : vector<16x1xf32>
    %11 = tpu.iota {dimensions = array<i32: 1>} : vector<1x32xi32>
    %12 = vector.broadcast %11 : vector<1x32xi32> to vector<16x32xi32>
    %13 = vector.broadcast %1 : vector<16x1xi32> to vector<16x32xi32>
    %14 = arith.cmpi eq, %12, %13 : vector<16x32xi32>
    %cst_4 = arith.constant 0.000000e+00 : f32
    %15 = vector.broadcast %cst_4 : f32 to vector<16x32xf32>
    %16 = arith.select %14, %0, %15 : vector<16x32xi1>, vector<16x32xf32>
    %cst_5 = arith.constant dense<0.000000e+00> : vector<16xf32>
    %17 = vector.multi_reduction <add>, %16, %cst_5 [1] : vector<16x32xf32> to vector<16xf32>
    %18 = vector.shape_cast %17 : vector<16xf32> to vector<16x1xf32>
    %19 = arith.subf %10, %18 : vector<16x1xf32>
    %20 = vector.shape_cast %19 : vector<16x1xf32> to vector<1x16x1xf32>
    %cst_6 = arith.constant dense<0.000000e+00> : vector<1xf32>
    %21 = vector.multi_reduction <add>, %20, %cst_6 [1, 2] : vector<1x16x1xf32> to vector<1xf32>
    %22 = vector.shape_cast %21 : vector<1xf32> to vector<1x1x1xf32>
    %23 = vector.extract %22[0, 0, 0] : f32 from vector<1x1x1xf32>
    %c0_7 = arith.constant 0 : index
    %c0_8 = arith.constant 0 : index
    %24 = memref.load %arg3[%c0_7, %c0_8] : memref<1x1xf32, #tpu.memory_space<smem>>
    memref.store %23, %arg3[%c0_7, %c0_8] : memref<1x1xf32, #tpu.memory_space<smem>>
    return
  }
  func.func @transform_0(%arg0: i32) -> (i32, i32) {
    %c0_i32 = arith.constant 0 : i32
    %c0_i32_0 = arith.constant 0 : i32
    return %arg0, %c0_i32 : i32, i32
  }
  func.func @transform_1(%arg0: i32) -> (i32, i32) {
    %c0_i32 = arith.constant 0 : i32
    %c0_i32_0 = arith.constant 0 : i32
    return %arg0, %c0_i32 : i32, i32
  }
  func.func @transform_2(%arg0: i32) -> (i32, i32) {
    %c0_i32 = arith.constant 0 : i32
    %c0_i32_0 = arith.constant 0 : i32
    return %arg0, %c0_i32 : i32, i32
  }
}

</mosaic_0001>

<llo_original>
// kernel: tpu_custom_call.1
$region0: #{tpu_custom_call.1}
  #allocation0 [shape = 'u32[]', space=smem, size = 0x4, offset = 0x4, fixed_abs, tag = 'smem constant byte address 0x4 - core index']
  #allocation1 [shape = 'u32[144,128]{1,0:T(1,128)}', space=vmem, size = 0x12000, scoped, tag = 'internal scratch']
  %s0 = inlined_call_operand.vmem [shape: f32[16,32], index: 0, kind: input, shape index: {}]
  %s1 = inlined_call_operand.vmem [shape: s32[16,1], index: 1, kind: input, shape index: {}]
  %s2 = inlined_call_operand.hbm [shape: f32[1,1], index: 2, kind: output, shape index: {}]
  %s3 = sld [smem:[#allocation0]]
  $region18: #{tpu_custom_call.1} parent=0
    _
  %s5 = ssub.s32 1, %s3
  %s6 = scalar_select 0, %s5, %s3
  $region1: #{tpu_custom_call.1} parent=0
    #allocation2 [shape = 'u8[512]{0}', space=smem, size = 0x200, scoped, tag = 'output window, operand 0, single buffered']
    #allocation3 [shape = 's32[1]{0}', space=sflag, size = 0x4, scoped, tag = 'scoped memory for tpu_custom_call.1']
    %7 = vsyncpa [#allocation3], 0
    // Predicated region
    $region2: #{tpu_custom_call.1} parent=1 // pred_check
      _
    $region3: #{tpu_custom_call.1} parent=1 // pred_check_branch
      %9 = sbr.rel (0) target = $region5
    $region4: #{tpu_custom_call.1} parent=1 // pred_region
      _
    $region5: #{tpu_custom_call.1} parent=1 // pred_fallthru
      _
    // Predicated region
    $region6: #{tpu_custom_call.1} parent=1 // pred_check
      _
    $region7: #{tpu_custom_call.1} parent=1 // pred_check_branch
      %11 = sbr.rel (0) target = $region9
    $region8: #{tpu_custom_call.1} parent=1 // pred_region
      _
    $region9: #{tpu_custom_call.1} parent=1 // pred_fallthru
      _
    %v12 = vld [vmem:[%s0] sm:$0xff]
    %v13 = vld [vmem:[%s0 + $0x8] sm:$0xff]
    %v14 = vld [vmem:[%s1] sm:$0xff]
    %v15 = vld [vmem:[%s1 + $0x8] sm:$0xff]
    %vm16 = vcmask 261120
    %v17 = vsel %vm16, %v12, -inf
    %18 = vmax.xlane.f32.xlu0 %v17
    %v19 = vpop.xlane.xlu0 %18
    %v20 = vsel %vm16, %v13, -inf
    %21 = vmax.xlane.f32.xlu0 %v20
    %v22 = vpop.xlane.xlu0 %21
    %v23 = vsub.f32 %v12, %v19
    %v24 = vsub.f32 %v13, %v22
    %v25 = vmul.f32 %v23, 1.442695
    %v26 = vpow.pop %v25
    %v27 = vmul.f32 %v24, 1.442695
    %v28 = vpow.pop %v27
    %v29 = vsel %vm16, %v26, 0.0
    %30 = vadd.xlane.f32.xlu0 %v29
    %v31 = vpop.xlane.xlu0 %30
    %v32 = vsel %vm16, %v28, 0.0
    %33 = vadd.xlane.f32.xlu0 %v32
    %v34 = vpop.xlane.xlu0 %33
    %v35 = vlog2.pop %v31
    %v36 = vmul.f32 %v35, 0.6931472
    %v37 = vlog2.pop %v34
    %v38 = vmul.f32 %v37, 0.6931472
    %v39 = vadd.f32 %v36, %v19
    %v40 = vadd.f32 %v38, %v22
    %v41 = vlaneseq
    %v42 = vand.u32 %v41, 127
    %43 = vset.pattern.permute.xlu0 0
    %44 = vperm.xlu0 %43, %v14
    %v45 = vpop.permute.xlu0 %44
    %46 = vset.pattern.permute.xlu0 0
    %47 = vperm.xlu0 %46, %v15
    %v48 = vpop.permute.xlu0 %47
    %vm49 = vcmp.eq.s32.totalorder %v42, %v45
    %vm50 = vcmp.eq.s32.totalorder %v42, %v48
    %v51 = vsel %vm49, %v12, 0.0
    %v52 = vsel %vm50, %v13, 0.0
    %v53 = vsel %vm16, %v51, 0.0
    %54 = vadd.xlane.f32.xlu0 %v53
    %v55 = vpop.xlane.xlu0 %54
    %v56 = vsel %vm16, %v52, 0.0
    %57 = vadd.xlane.f32.xlu0 %v56
    %v58 = vpop.xlane.xlu0 %57
    %v59 = vsub.f32 %v39, %v55
    %v60 = vsub.f32 %v40, %v58
    %vm61 = vcmask 7168
    %v62 = vsel %vm61, %v59, 0.0
    %v63 = vsel %vm61, %v60, 0.0
    %v64 = vadd.f32 %v62, %v63
    %65 = vadd.xlane.f32.xlu0 %v64
    %v66 = vpop.xlane.xlu0 %65
    %v67 = vrot.slane %v66, 4
    %v68 = vadd.f32 %v66, %v67
    %v69 = vrot.slane %v68, 2
    %v70 = vadd.f32 %v68, %v69
    %v71 = vrot.slane %v70, 1
    %v72 = vadd.f32 %v70, %v71
    %s73 = vtos %v72
    %s74 = scalar_lea.smem [#allocation2], 0
    %75 = sst [smem:[%s74]] %s73
    // Predicated region
    $region10: #{tpu_custom_call.1} parent=1 // pred_check
      _
    $region11: #{tpu_custom_call.1} parent=1 // pred_check_branch
      %77 = sbr.rel (0) target = $region13
    $region12: #{tpu_custom_call.1} parent=1 // pred_region
      %s79 = ssub.s32 16, 16
      %80 = vsyncadd [#allocation3], %s79
      %83 = dma.smem_to_hbm [#allocation2], 16, %s2, [#allocation3]
    $region13: #{tpu_custom_call.1} parent=1 // pred_fallthru
      _
    // Predicated region
    $region14: #{tpu_custom_call.1} parent=1 // pred_check
      _
    $region15: #{tpu_custom_call.1} parent=1 // pred_check_branch
      %85 = sbr.rel (0) target = $region17
    $region16: #{tpu_custom_call.1} parent=1 // pred_region
      %86 = dma.done [#allocation3], 16
    $region17: #{tpu_custom_call.1} parent=1 // pred_fallthru
      _
    %87 = sfence
    %88 = vsyncpa [#allocation3], 1

</llo_original>
